<compile_context>
chip_gen: v5e
topology: v5e:2x2
jax: 0.10.0
libtpu: 0.0.40
codegen_flags: <defaults>
</compile_context>

<pallas_src>
import inspect

import jax
import jax.numpy as jnp
from jax.experimental import pallas as pl
from jax.experimental.pallas import tpu as pltpu

IN_FEATURES = 784
OUT_FEATURES = 10

# 2048-row tiles: ~6.1 MiB x-tile (x2 double-buffered) + ~1 MiB padded out tile
# (x2) + ~0.4 MiB resident weight ~= 16 MiB live -> comfortably inside the
# 32 MiB scoped-VMEM limit we request below on every generation.
DEFAULT_BATCH_TILE = 2048
_SMALL_BATCH = 256                      # below this, a single full-extent block
_VMEM_LIMIT_BYTES = 32 * 1024 * 1024    # raise v5e's 16 MiB default; safe on v7x (64 MiB phys)

# Feature-detect single-buffering support for grid-invariant operands.
_SUPPORTS_PIPELINE_MODE = (
    hasattr(pl, "Buffered")
    and "pipeline_mode" in inspect.signature(pl.BlockSpec).parameters
)


def _round_up(x, m):
    return ((x + m - 1) // m) * m


def _linear_softmax_kernel(x_ref, w_ref, b_ref, o_ref):
    # x_ref: [TB, 784], w_ref: [784, 10], b_ref: [1, 10], o_ref: [TB, 10]
    x = x_ref[...]
    w = w_ref[...]
    b = b_ref[...]

    logits = jnp.dot(x, w, preferred_element_type=jnp.float32) + b  # [TB, 10]

    # Numerically stable softmax over the last axis (torch dim=1).
    m = jnp.max(logits, axis=-1, keepdims=True)
    e = jnp.exp(logits - m)
    s = jnp.sum(e, axis=-1, keepdims=True)
    o_ref[...] = (e * pl.reciprocal(s, approx=False)).astype(o_ref.dtype)


def _resident_spec(block_shape):
    """BlockSpec for a grid-invariant operand (same block every step).

    Single-buffered when the JAX version supports pipeline_mode; otherwise the
    default (double-buffered) spec — only costs ~0.4 MiB of VMEM headroom.
    """
    index_map = lambda i: (0, 0)
    if _SUPPORTS_PIPELINE_MODE:
        try:
            return pl.BlockSpec(block_shape, index_map,
                                pipeline_mode=pl.Buffered(1))
        except TypeError:
            pass
    return pl.BlockSpec(block_shape, index_map)


def _pick_batch_tile(B, batch_tile):
    """Choose the per-step row tile.

    - Tiny batches: one full-extent block (exempt from the /8 sublane rule).
    - Moderate batches: split into ~4 grid steps (multiple of 8 rows) so both
      v7x TensorCores receive grid steps and the pipeline has work to overlap.
    - Large batches: cap at batch_tile and stream.
    """
    if B < _SMALL_BATCH:
        return B
    if B <= batch_tile:
        return min(_round_up(pl.cdiv(B, 4), 8), batch_tile)
    return batch_tile


def net_forward(x, weight, bias, *, batch_tile=DEFAULT_BATCH_TILE):
    """Forward pass of Net: softmax(Linear(784 -> 10)(x.reshape(-1, 784)), dim=1).

    Args:
      x: any shape whose elements flatten to [B, 784] (e.g. [B, 1, 28, 28]), f32.
      weight: [10, 784] (torch nn.Linear layout).
      bias: [10].
      batch_tile: max rows of x per grid step (must be a multiple of 8).
    Returns:
      [B, 10] float32 probabilities.
    """
    if batch_tile % 8 != 0:
        raise ValueError(f"batch_tile must be a multiple of 8, got {batch_tile}")

    x2d = x.reshape(-1, IN_FEATURES).astype(jnp.float32)      # matches torch reshape
    B = x2d.shape[0]
    w_t = weight.T.astype(jnp.float32)                         # [784, 10]
    b2d = bias.reshape(1, OUT_FEATURES).astype(jnp.float32)    # [1, 10]

    tb = _pick_batch_tile(B, batch_tile)
    grid = (pl.cdiv(B, tb),)

    cost = pl.CostEstimate(
        flops=2 * B * IN_FEATURES * OUT_FEATURES,
        transcendentals=B * OUT_FEATURES,  # one exp per logit
        bytes_accessed=4 * (B * IN_FEATURES            # x stream (dominant)
                            + IN_FEATURES * OUT_FEATURES
                            + OUT_FEATURES
                            + B * OUT_FEATURES),       # probs writeback
    )

    out = pl.pallas_call(
        _linear_softmax_kernel,
        out_shape=jax.ShapeDtypeStruct((B, OUT_FEATURES), jnp.float32),
        grid_spec=pltpu.PrefetchScalarGridSpec(
            num_scalar_prefetch=0,
            grid=grid,
            in_specs=[
                # x streamed in batch tiles (double-buffered by the pipeline).
                pl.BlockSpec((tb, IN_FEATURES), lambda i: (i, 0)),
                # weight & bias: constant block index -> VMEM-resident,
                # single-buffered where supported.
                _resident_spec((IN_FEATURES, OUT_FEATURES)),
                _resident_spec((1, OUT_FEATURES)),
            ],
            out_specs=pl.BlockSpec((tb, OUT_FEATURES), lambda i: (i, 0)),
        ),
        compiler_params=pltpu.CompilerParams(
            # Rows are independent -> parallel batch axis (shards grid steps
            # across the two TensorCores on v7x; harmless on v5e/v6e).
            dimension_semantics=("parallel",),
            vmem_limit_bytes=_VMEM_LIMIT_BYTES,
        ),
        cost_estimate=cost,
    )(x2d, w_t, b2d)
    return out


if __name__ == "__main__":
    key = jax.random.PRNGKey(0)
    kx1, kx2, kw, kb = jax.random.split(key, 4)

    # Deterministic init mimicking nn.Linear default (uniform in +-1/sqrt(fan_in))
    bound = 1.0 / (IN_FEATURES ** 0.5)
    weight = jax.random.uniform(kw, (OUT_FEATURES, IN_FEATURES),
                                minval=-bound, maxval=bound, dtype=jnp.float32)
    bias = jax.random.uniform(kb, (OUT_FEATURES,),
                              minval=-bound, maxval=bound, dtype=jnp.float32)

    # --- small batch: single full-extent block path ---
    B1 = 8
    x_small = jax.random.normal(kx1, (B1, 1, 28, 28), dtype=jnp.float32)
    out_small = jax.block_until_ready(net_forward(x_small, weight, bias))
    ref_small = jax.nn.softmax(x_small.reshape(-1, IN_FEATURES) @ weight.T + bias, axis=1)
    assert out_small.shape == (B1, OUT_FEATURES)
    assert jnp.allclose(out_small, ref_small, atol=1e-5, rtol=1e-5)
    assert jnp.allclose(jnp.sum(out_small, axis=1), 1.0, atol=1e-5)

    # --- moderate batch: multi-step grid + ragged tail path ---
    B2 = 520
    x_mid = jax.random.normal(kx2, (B2, 1, 28, 28), dtype=jnp.float32)
    out_mid = jax.block_until_ready(net_forward(x_mid, weight, bias))
    ref_mid = jax.nn.softmax(x_mid.reshape(-1, IN_FEATURES) @ weight.T + bias, axis=1)
    assert out_mid.shape == (B2, OUT_FEATURES)
    assert jnp.allclose(out_mid, ref_mid, atol=1e-5, rtol=1e-5)
    assert jnp.allclose(jnp.sum(out_mid, axis=1), 1.0, atol=1e-5)

    print("KERNEL_OK")
</pallas_src>

<mosaic_0001>
module attributes {stable_mosaic.version = 11 : i64} {
  func.func @_linear_softmax_kernel(%arg0: i32, %arg1: memref<8x784xf32, #tpu.memory_space<vmem>>, %arg2: memref<784x10xf32, #tpu.memory_space<vmem>>, %arg3: memref<1x10xf32, #tpu.memory_space<vmem>>, %arg4: memref<8x10xf32, #tpu.memory_space<vmem>>) attributes {dimension_semantics = [#tpu.dimension_semantics<parallel>], iteration_bounds = array<i64: 1>, scalar_prefetch = 0 : i64, scratch_operands = 0 : i64, tpu.core_type = #tpu.core_type<tc>, window_params = [{transform_indices = @transform_0, window_bounds = array<i64: 8, 784>}, {pipeline_mode = #tpu.pipeline_mode<synchronous>, transform_indices = @transform_1, window_bounds = array<i64: 784, 10>}, {pipeline_mode = #tpu.pipeline_mode<synchronous>, transform_indices = @transform_2, window_bounds = array<i64: 1, 10>}, {transform_indices = @transform_3, window_bounds = array<i64: 8, 10>}]} {
    %c0 = arith.constant 0 : index
    %c0_0 = arith.constant 0 : index
    %0 = vector.load %arg1[%c0, %c0_0] : memref<8x784xf32, #tpu.memory_space<vmem>>, vector<8x784xf32>
    %c0_1 = arith.constant 0 : index
    %c0_2 = arith.constant 0 : index
    %1 = vector.load %arg2[%c0_1, %c0_2] : memref<784x10xf32, #tpu.memory_space<vmem>>, vector<784x10xf32>
    %c0_3 = arith.constant 0 : index
    %c0_4 = arith.constant 0 : index
    %2 = vector.load %arg3[%c0_3, %c0_4] : memref<1x10xf32, #tpu.memory_space<vmem>>, vector<1x10xf32>
    %cst = arith.constant dense<0.000000e+00> : vector<8x10xf32>
    %3 = tpu.matmul %0, %1, %cst {dimension_numbers = #tpu.dot_dimension_numbers<[1], [0], [0], [1], [0, 0, 1, 1], [], []>} : vector<8x784xf32>, vector<784x10xf32>, vector<8x10xf32> -> vector<8x10xf32>
    %4 = vector.broadcast %2 : vector<1x10xf32> to vector<8x10xf32>
    %5 = arith.addf %3, %4 : vector<8x10xf32>
    %cst_5 = arith.constant dense<0xFF800000> : vector<8xf32>
    %6 = vector.multi_reduction <maximumf>, %5, %cst_5 [1] : vector<8x10xf32> to vector<8xf32>
    %7 = vector.shape_cast %6 : vector<8xf32> to vector<8x1xf32>
    %8 = vector.broadcast %7 : vector<8x1xf32> to vector<8x10xf32>
    %9 = arith.subf %5, %8 : vector<8x10xf32>
    %10 = math.exp %9 : vector<8x10xf32>
    %cst_6 = arith.constant dense<0.000000e+00> : vector<8xf32>
    %11 = vector.multi_reduction <add>, %10, %cst_6 [1] : vector<8x10xf32> to vector<8xf32>
    %12 = vector.shape_cast %11 : vector<8xf32> to vector<8x1xf32>
    %13 = tpu.reciprocal %12 : vector<8x1xf32> -> vector<8x1xf32>
    %14 = vector.broadcast %13 : vector<8x1xf32> to vector<8x10xf32>
    %15 = arith.mulf %10, %14 : vector<8x10xf32>
    %c0_7 = arith.constant 0 : index
    %c0_8 = arith.constant 0 : index
    %16 = vector.load %arg4[%c0_7, %c0_8] : memref<8x10xf32, #tpu.memory_space<vmem>>, vector<8x10xf32>
    tpu.vector_store %arg4[%c0_7, %c0_8], %15 {strides = array<i32>} : memref<8x10xf32, #tpu.memory_space<vmem>>, vector<8x10xf32>,
    return
  }
  func.func @transform_0(%arg0: i32) -> (i32, i32) {
    %c0_i32 = arith.constant 0 : i32
    %c0_i32_0 = arith.constant 0 : i32
    return %arg0, %c0_i32 : i32, i32
  }
  func.func @transform_1(%arg0: i32) -> (i32, i32) {
    %c0_i32 = arith.constant 0 : i32
    %c0_i32_0 = arith.constant 0 : i32
    %c0_i32_1 = arith.constant 0 : i32
    return %c0_i32, %c0_i32_0 : i32, i32
  }
  func.func @transform_2(%arg0: i32) -> (i32, i32) {
    %c0_i32 = arith.constant 0 : i32
    %c0_i32_0 = arith.constant 0 : i32
    %c0_i32_1 = arith.constant 0 : i32
    return %c0_i32, %c0_i32_0 : i32, i32
  }
  func.func @transform_3(%arg0: i32) -> (i32, i32) {
    %c0_i32 = arith.constant 0 : i32
    %c0_i32_0 = arith.constant 0 : i32
    return %arg0, %c0_i32 : i32, i32
  }
}

</mosaic_0001>

<llo_original>
// kernel: tpu_custom_call.1
$region0: #{tpu_custom_call.1}
  #allocation0 [shape = 'u32[]', space=smem, size = 0x4, offset = 0x4, fixed_abs, tag = 'smem constant byte address 0x4 - core index']
  #allocation1 [shape = 'u32[72,128]{1,0:T(1,128)}', space=vmem, size = 0x9000, scoped, tag = 'internal scratch']
  %s0 = inlined_call_operand.vmem [shape: f32[8,784], index: 0, kind: input, shape index: {}]
  %s1 = inlined_call_operand.vmem [shape: f32[784,10], index: 1, kind: input, shape index: {}]
  %s2 = inlined_call_operand.vmem [shape: f32[1,10], index: 2, kind: input, shape index: {}]
  %s3 = inlined_call_operand.hbm [shape: f32[8,10], index: 3, kind: output, shape index: {}]
  %s4 = sld [smem:[#allocation0]]
  $region22: #{tpu_custom_call.1} parent=0
    _
  %s6 = ssub.s32 1, %s4
  %s7 = scalar_select 0, %s6, %s4
  $region1: #{tpu_custom_call.1} parent=0
    #allocation2 [shape = 'u8[4096]{0}', space=vmem, size = 0x1000, scoped, tag = 'output window, operand 0, single buffered']
    #allocation3 [shape = 's32[1]{0}', space=sflag, size = 0x4, scoped, tag = 'scoped memory for tpu_custom_call.1']
    %8 = vsyncpa [#allocation3], 0
    // Predicated region
    $region2: #{tpu_custom_call.1} parent=1 // pred_check
      _
    $region3: #{tpu_custom_call.1} parent=1 // pred_check_branch
      %10 = sbr.rel (0) target = $region5
    $region4: #{tpu_custom_call.1} parent=1 // pred_region
      _
    $region5: #{tpu_custom_call.1} parent=1 // pred_fallthru
      _
    // Predicated region
    $region6: #{tpu_custom_call.1} parent=1 // pred_check
      _
    $region7: #{tpu_custom_call.1} parent=1 // pred_check_branch
      %12 = sbr.rel (0) target = $region9
    $region8: #{tpu_custom_call.1} parent=1 // pred_region
      _
    $region9: #{tpu_custom_call.1} parent=1 // pred_fallthru
      _
    // Predicated region
    $region10: #{tpu_custom_call.1} parent=1 // pred_check
      _
    $region11: #{tpu_custom_call.1} parent=1 // pred_check_branch
      %14 = sbr.rel (0) target = $region13
    $region12: #{tpu_custom_call.1} parent=1 // pred_region
      _
    $region13: #{tpu_custom_call.1} parent=1 // pred_fallthru
      _
    %v15 = vld [vmem:[%s0] sm:$0xff]
    %v16 = vld [vmem:[%s0 + $0x8] sm:$0xff]
    %v17 = vld [vmem:[%s0 + $0x10] sm:$0xff]
    %v18 = vld [vmem:[%s0 + $0x18] sm:$0xff]
    %v19 = vld [vmem:[%s0 + $0x20] sm:$0xff]
    %v20 = vld [vmem:[%s0 + $0x28] sm:$0xff]
    %v21 = vld [vmem:[%s0 + $0x30] sm:$0xff]
    %v22 = vld [vmem:[%s1] sm:$0xff]
    %v23 = vld [vmem:[%s1 + $0x8] sm:$0xff]
    %v24 = vld [vmem:[%s1 + $0x10] sm:$0xff]
    %v25 = vld [vmem:[%s1 + $0x18] sm:$0xff]
    %v26 = vld [vmem:[%s1 + $0x20] sm:$0xff]
    %v27 = vld [vmem:[%s1 + $0x28] sm:$0xff]
    %v28 = vld [vmem:[%s1 + $0x30] sm:$0xff]
    %v29 = vld [vmem:[%s1 + $0x38] sm:$0xff]
    %v30 = vld [vmem:[%s1 + $0x40] sm:$0xff]
    %v31 = vld [vmem:[%s1 + $0x48] sm:$0xff]
    %v32 = vld [vmem:[%s1 + $0x50] sm:$0xff]
    %v33 = vld [vmem:[%s1 + $0x58] sm:$0xff]
    %v34 = vld [vmem:[%s1 + $0x60] sm:$0xff]
    %v35 = vld [vmem:[%s1 + $0x68] sm:$0xff]
    %v36 = vld [vmem:[%s1 + $0x70] sm:$0xff]
    %v37 = vld [vmem:[%s1 + $0x78] sm:$0xff]
    %v38 = vld [vmem:[%s1 + $0x80] sm:$0xff]
    %v39 = vld [vmem:[%s1 + $0x88] sm:$0xff]
    %v40 = vld [vmem:[%s1 + $0x90] sm:$0xff]
    %v41 = vld [vmem:[%s1 + $0x98] sm:$0xff]
    %v42 = vld [vmem:[%s1 + $0xa0] sm:$0xff]
    %v43 = vld [vmem:[%s1 + $0xa8] sm:$0xff]
    %v44 = vld [vmem:[%s1 + $0xb0] sm:$0xff]
    %v45 = vld [vmem:[%s1 + $0xb8] sm:$0xff]
    %v46 = vld [vmem:[%s1 + $0xc0] sm:$0xff]
    %v47 = vld [vmem:[%s1 + $0xc8] sm:$0xff]
    %v48 = vld [vmem:[%s1 + $0xd0] sm:$0xff]
    %v49 = vld [vmem:[%s1 + $0xd8] sm:$0xff]
    %v50 = vld [vmem:[%s1 + $0xe0] sm:$0xff]
    %v51 = vld [vmem:[%s1 + $0xe8] sm:$0xff]
    %v52 = vld [vmem:[%s1 + $0xf0] sm:$0xff]
    %v53 = vld [vmem:[%s1 + $0xf8] sm:$0xff]
    %v54 = vld [vmem:[%s1 + $0x100] sm:$0xff]
    %v55 = vld [vmem:[%s1 + $0x108] sm:$0xff]
    %v56 = vld [vmem:[%s1 + $0x110] sm:$0xff]
    %v57 = vld [vmem:[%s1 + $0x118] sm:$0xff]
    %v58 = vld [vmem:[%s1 + $0x120] sm:$0xff]
    %v59 = vld [vmem:[%s1 + $0x128] sm:$0xff]
    %v60 = vld [vmem:[%s1 + $0x130] sm:$0xff]
    %v61 = vld [vmem:[%s1 + $0x138] sm:$0xff]
    %v62 = vld [vmem:[%s1 + $0x140] sm:$0xff]
    %v63 = vld [vmem:[%s1 + $0x148] sm:$0xff]
    %v64 = vld [vmem:[%s1 + $0x150] sm:$0xff]
    %v65 = vld [vmem:[%s1 + $0x158] sm:$0xff]
    %v66 = vld [vmem:[%s1 + $0x160] sm:$0xff]
    %v67 = vld [vmem:[%s1 + $0x168] sm:$0xff]
    %v68 = vld [vmem:[%s1 + $0x170] sm:$0xff]
    %v69 = vld [vmem:[%s1 + $0x178] sm:$0xff]
    %v70 = vld [vmem:[%s1 + $0x180] sm:$0xff]
    %v71 = vld [vmem:[%s1 + $0x188] sm:$0xff]
    %v72 = vld [vmem:[%s1 + $0x190] sm:$0xff]
    %v73 = vld [vmem:[%s1 + $0x198] sm:$0xff]
    %v74 = vld [vmem:[%s1 + $0x1a0] sm:$0xff]
    %v75 = vld [vmem:[%s1 + $0x1a8] sm:$0xff]
    %v76 = vld [vmem:[%s1 + $0x1b0] sm:$0xff]
    %v77 = vld [vmem:[%s1 + $0x1b8] sm:$0xff]
    %v78 = vld [vmem:[%s1 + $0x1c0] sm:$0xff]
    %v79 = vld [vmem:[%s1 + $0x1c8] sm:$0xff]
    %v80 = vld [vmem:[%s1 + $0x1d0] sm:$0xff]
    %v81 = vld [vmem:[%s1 + $0x1d8] sm:$0xff]
    %v82 = vld [vmem:[%s1 + $0x1e0] sm:$0xff]
    %v83 = vld [vmem:[%s1 + $0x1e8] sm:$0xff]
    %v84 = vld [vmem:[%s1 + $0x1f0] sm:$0xff]
    %v85 = vld [vmem:[%s1 + $0x1f8] sm:$0xff]
    %v86 = vld [vmem:[%s1 + $0x200] sm:$0xff]
    %v87 = vld [vmem:[%s1 + $0x208] sm:$0xff]
    %v88 = vld [vmem:[%s1 + $0x210] sm:$0xff]
    %v89 = vld [vmem:[%s1 + $0x218] sm:$0xff]
    %v90 = vld [vmem:[%s1 + $0x220] sm:$0xff]
    %v91 = vld [vmem:[%s1 + $0x228] sm:$0xff]
    %v92 = vld [vmem:[%s1 + $0x230] sm:$0xff]
    %v93 = vld [vmem:[%s1 + $0x238] sm:$0xff]
    %v94 = vld [vmem:[%s1 + $0x240] sm:$0xff]
    %v95 = vld [vmem:[%s1 + $0x248] sm:$0xff]
    %v96 = vld [vmem:[%s1 + $0x250] sm:$0xff]
    %v97 = vld [vmem:[%s1 + $0x258] sm:$0xff]
    %v98 = vld [vmem:[%s1 + $0x260] sm:$0xff]
    %v99 = vld [vmem:[%s1 + $0x268] sm:$0xff]
    %v100 = vld [vmem:[%s1 + $0x270] sm:$0xff]
    %v101 = vld [vmem:[%s1 + $0x278] sm:$0xff]
    %v102 = vld [vmem:[%s1 + $0x280] sm:$0xff]
    %v103 = vld [vmem:[%s1 + $0x288] sm:$0xff]
    %v104 = vld [vmem:[%s1 + $0x290] sm:$0xff]
    %v105 = vld [vmem:[%s1 + $0x298] sm:$0xff]
    %v106 = vld [vmem:[%s1 + $0x2a0] sm:$0xff]
    %v107 = vld [vmem:[%s1 + $0x2a8] sm:$0xff]
    %v108 = vld [vmem:[%s1 + $0x2b0] sm:$0xff]
    %v109 = vld [vmem:[%s1 + $0x2b8] sm:$0xff]
    %v110 = vld [vmem:[%s1 + $0x2c0] sm:$0xff]
    %v111 = vld [vmem:[%s1 + $0x2c8] sm:$0xff]
    %v112 = vld [vmem:[%s1 + $0x2d0] sm:$0xff]
    %v113 = vld [vmem:[%s1 + $0x2d8] sm:$0xff]
    %v114 = vld [vmem:[%s1 + $0x2e0] sm:$0xff]
    %v115 = vld [vmem:[%s1 + $0x2e8] sm:$0xff]
    %v116 = vld [vmem:[%s1 + $0x2f0] sm:$0xff]
    %v117 = vld [vmem:[%s1 + $0x2f8] sm:$0xff]
    %v118 = vld [vmem:[%s1 + $0x300] sm:$0xff]
    %v119 = vld [vmem:[%s1 + $0x308] sm:$0xff]
    %v120 = vld [vmem:[%s2] sm:$0x1]
    %v122 = vperm.slane %v120, 0
    %vm124 = vcmask 130048
    %v126 = vsel %vm124, %v21, 0
    %128 = vmatpush.msra.mxu0 %v37
    %129 = vmatpush.msra.mxu0 %v36
    %130 = vmatpush.msra.mxu0 %v35
    %131 = vmatpush.msra.mxu0 %v34
    %132 = vmatpush.msra.mxu0 %v33
    %133 = vmatpush.msra.mxu0 %v32
    %134 = vmatpush.msra.mxu0 %v31
    %135 = vmatpush.msra.mxu0 %v30
    %136 = vmatpush.msra.mxu0 %v29
    %137 = vmatpush.msra.mxu0 %v28
    %138 = vmatpush.msra.mxu0 %v27
    %139 = vmatpush.msra.mxu0 %v26
    %140 = vmatpush.msra.mxu0 %v25
    %141 = vmatpush.msra.mxu0 %v24
    %142 = vmatpush.msra.mxu0 %v23
    %143 = vmatpush.msra.mxu0 %v22
    %144 = vmatmul.f32.gmra.mxu0 %v15
    %v145 = vpop.f32.mrf.mxu0
    %v146 = vadd.f32 %v122, %v145
    %147 = vdwg.mxu0
    %148 = vmatpush.msra.mxu0 %v53
    %149 = vmatpush.msra.mxu0 %v52
    %150 = vmatpush.msra.mxu0 %v51
    %151 = vmatpush.msra.mxu0 %v50
    %152 = vmatpush.msra.mxu0 %v49
    %153 = vmatpush.msra.mxu0 %v48
    %154 = vmatpush.msra.mxu0 %v47
    %155 = vmatpush.msra.mxu0 %v46
    %156 = vmatpush.msra.mxu0 %v45
    %157 = vmatpush.msra.mxu0 %v44
    %158 = vmatpush.msra.mxu0 %v43
    %159 = vmatpush.msra.mxu0 %v42
    %160 = vmatpush.msra.mxu0 %v41
    %161 = vmatpush.msra.mxu0 %v40
    %162 = vmatpush.msra.mxu0 %v39
    %163 = vmatpush.msra.mxu0 %v38
    %164 = vmatmul.f32.gmra.mxu0 %v16
    %v165 = vpop.f32.mrf.mxu0
    %v166 = vadd.f32 %v146, %v165
    %167 = vdwg.mxu0
    %168 = vmatpush.msra.mxu0 %v69
    %169 = vmatpush.msra.mxu0 %v68
    %170 = vmatpush.msra.mxu0 %v67
    %171 = vmatpush.msra.mxu0 %v66
    %172 = vmatpush.msra.mxu0 %v65
    %173 = vmatpush.msra.mxu0 %v64
    %174 = vmatpush.msra.mxu0 %v63
    %175 = vmatpush.msra.mxu0 %v62
    %176 = vmatpush.msra.mxu0 %v61
    %177 = vmatpush.msra.mxu0 %v60
    %178 = vmatpush.msra.mxu0 %v59
    %179 = vmatpush.msra.mxu0 %v58
    %180 = vmatpush.msra.mxu0 %v57
    %181 = vmatpush.msra.mxu0 %v56
    %182 = vmatpush.msra.mxu0 %v55
    %183 = vmatpush.msra.mxu0 %v54
    %184 = vmatmul.f32.gmra.mxu0 %v17
    %v185 = vpop.f32.mrf.mxu0
    %v186 = vadd.f32 %v166, %v185
    %187 = vdwg.mxu0
    %188 = vmatpush.msra.mxu0 %v85
    %189 = vmatpush.msra.mxu0 %v84
    %190 = vmatpush.msra.mxu0 %v83
    %191 = vmatpush.msra.mxu0 %v82
    %192 = vmatpush.msra.mxu0 %v81
    %193 = vmatpush.msra.mxu0 %v80
    %194 = vmatpush.msra.mxu0 %v79
    %195 = vmatpush.msra.mxu0 %v78
    %196 = vmatpush.msra.mxu0 %v77
    %197 = vmatpush.msra.mxu0 %v76
    %198 = vmatpush.msra.mxu0 %v75
    %199 = vmatpush.msra.mxu0 %v74
    %200 = vmatpush.msra.mxu0 %v73
    %201 = vmatpush.msra.mxu0 %v72
    %202 = vmatpush.msra.mxu0 %v71
    %203 = vmatpush.msra.mxu0 %v70
    %204 = vmatmul.f32.gmra.mxu0 %v18
    %v205 = vpop.f32.mrf.mxu0
    %v206 = vadd.f32 %v186, %v205
    %207 = vdwg.mxu0
    %208 = vmatpush.msra.mxu0 %v101
    %209 = vmatpush.msra.mxu0 %v100
    %210 = vmatpush.msra.mxu0 %v99
    %211 = vmatpush.msra.mxu0 %v98
    %212 = vmatpush.msra.mxu0 %v97
    %213 = vmatpush.msra.mxu0 %v96
    %214 = vmatpush.msra.mxu0 %v95
    %215 = vmatpush.msra.mxu0 %v94
    %216 = vmatpush.msra.mxu0 %v93
    %217 = vmatpush.msra.mxu0 %v92
    %218 = vmatpush.msra.mxu0 %v91
    %219 = vmatpush.msra.mxu0 %v90
    %220 = vmatpush.msra.mxu0 %v89
    %221 = vmatpush.msra.mxu0 %v88
    %222 = vmatpush.msra.mxu0 %v87
    %223 = vmatpush.msra.mxu0 %v86
    %224 = vmatmul.f32.gmra.mxu0 %v19
    %v225 = vpop.f32.mrf.mxu0
    %v226 = vadd.f32 %v206, %v225
    %227 = vdwg.mxu0
    %228 = vmatpush.msra.mxu0 %v117
    %229 = vmatpush.msra.mxu0 %v116
    %230 = vmatpush.msra.mxu0 %v115
    %231 = vmatpush.msra.mxu0 %v114
    %232 = vmatpush.msra.mxu0 %v113
    %233 = vmatpush.msra.mxu0 %v112
    %234 = vmatpush.msra.mxu0 %v111
    %235 = vmatpush.msra.mxu0 %v110
    %236 = vmatpush.msra.mxu0 %v109
    %237 = vmatpush.msra.mxu0 %v108
    %238 = vmatpush.msra.mxu0 %v107
    %239 = vmatpush.msra.mxu0 %v106
    %240 = vmatpush.msra.mxu0 %v105
    %241 = vmatpush.msra.mxu0 %v104
    %242 = vmatpush.msra.mxu0 %v103
    %243 = vmatpush.msra.mxu0 %v102
    %244 = vmatmul.f32.gmra.mxu0 %v20
    %v245 = vpop.f32.mrf.mxu0
    %v246 = vadd.f32 %v226, %v245
    %247 = vdwg.mxu0
    %248 = vmatpush.msra.mxu0 0.0
    %249 = vmatpush.msra.mxu0 0.0
    %250 = vmatpush.msra.mxu0 0.0
    %251 = vmatpush.msra.mxu0 0.0
    %252 = vmatpush.msra.mxu0 0.0
    %253 = vmatpush.msra.mxu0 0.0
    %254 = vmatpush.msra.mxu0 0.0
    %255 = vmatpush.msra.mxu0 0.0
    %256 = vmatpush.msra.mxu0 0.0
    %257 = vmatpush.msra.mxu0 0.0
    %258 = vmatpush.msra.mxu0 0.0
    %259 = vmatpush.msra.mxu0 0.0
    %260 = vmatpush.msra.mxu0 0.0
    %261 = vmatpush.msra.mxu0 0.0
    %262 = vmatpush.msra.mxu0 %v119
    %263 = vmatpush.msra.mxu0 %v118
    %264 = vmatmul.f32.gmra.mxu0 %v126
    %v265 = vpop.f32.mrf.mxu0
    %v266 = vadd.f32 %v246, %v265
    %267 = vdwg.mxu0
    %vm268 = vcmask 80896
    %v269 = vsel %vm268, %v266, -inf
    %270 = vmax.xlane.f32.xlu0 %v269
    %v271 = vpop.xlane.xlu0 %270
    %v272 = vsub.f32 %v266, %v271
    %v273 = vmul.f32 %v272, 1.442695
    %v274 = vpow.pop %v273
    %v275 = vsel %vm268, %v274, 0.0
    %276 = vadd.xlane.f32.xlu0 %v275
    %v277 = vpop.xlane.xlu0 %276
    %v278 = vrcp.pop %v277
    %v279 = vmul.f32 %v277, %v278
    %v280 = vsub.f32 1.0, %v279
    %v281 = vmul.f32 %v278, %v280
    %v282 = vadd.f32 %v278, %v281
    %vm283 = vweird.f32 %v277
    %vm284 = vweird.f32 %v278
    %vm285 = vmor %vm283, %vm284
    %v286 = vsel %vm285, %v278, %v282
    %v287 = vand.u32 2147483647, %v277
    %vm288 = vcmp.eq.f32.partialorder %v287, 8.507059e+37
    %v289 = vand.u32 %v277, 2147483648
    %v290 = vor.u32 1.1754944e-38, %v289
    %v291 = vsel %vm288, %v290, %v286
    %v292 = vmul.f32 %v274, %v291
    %293 = vst.msk [vmem:[#allocation2] sm:$0xff] %vm268, %v292
    // Predicated region
    $region14: #{tpu_custom_call.1} parent=1 // pred_check
      _
    $region15: #{tpu_custom_call.1} parent=1 // pred_check_branch
      %295 = sbr.rel (0) target = $region17
    $region16: #{tpu_custom_call.1} parent=1 // pred_region
      %297 = vsyncadd [#allocation3], 0
      %s299 = sshll.u32 [#allocation2], 4
      %s300 = int_to_ptr.vmem [resolvable:$true] %s299
      %s301 = sshll.u32 %s3, 4
      %s302 = int_to_ptr.hbm [resolvable:$true] %s301
      %304 = dma.vmem_to_hbm [thread:$0]  %s300, 128, %s302, [#allocation3]
    $region17: #{tpu_custom_call.1} parent=1 // pred_fallthru
      _
    // Predicated region
    $region18: #{tpu_custom_call.1} parent=1 // pred_check
      _
    $region19: #{tpu_custom_call.1} parent=1 // pred_check_branch
      %306 = sbr.rel (0) target = $region21
    $region20: #{tpu_custom_call.1} parent=1 // pred_region
      %308 = dma.done [#allocation3], 128
    $region21: #{tpu_custom_call.1} parent=1 // pred_fallthru
      _
    %309 = vsyncpa [#allocation3], 1

</llo_original>
